<compile_context>
chip_gen: v7x
topology: tpu7x:2x2x1
jax: 0.10.0
libtpu: 0.0.40
codegen_flags: <defaults>
</compile_context>

<pallas_src>
import jax
import jax.numpy as jnp
from jax.experimental import pallas as pl
from jax.experimental.pallas import tpu as pltpu


def attention_pooling_kernel(x_ref, w_ref, o_ref):
    # x_ref: (BB, T, D) VMEM   w_ref: (1, D) VMEM (resident)   o_ref: (BB, D) VMEM
    w = w_ref[...].astype(x_ref.dtype)                            # (1, D)

    # --- Pass 1: attention scores.  Product stays in the input dtype; only
    # the reduction accumulates in f32 (small (BB, T) result). ---
    scores = jnp.sum(x_ref[...] * w, axis=-1, dtype=jnp.float32)  # (BB, T)

    # Numerically stable softmax over T with deferred normalization.
    m = jnp.max(scores, axis=-1, keepdims=True)                   # (BB, 1)
    e = jnp.exp(scores - m)                                       # (BB, T)
    denom = jnp.sum(e, axis=-1, keepdims=True)                    # (BB, 1)

    # --- Pass 2: weighted sum over T on the MXU: batched (1,T)@(T,D) per row.
    # x is re-read from VMEM (cheap) instead of holding a full f32 temporary.
    weighted = jnp.einsum(
        "bqt,btd->bqd",
        e[:, None, :].astype(x_ref.dtype),
        x_ref[...],
        preferred_element_type=jnp.float32)                       # (BB, 1, D)

    out = weighted[:, 0, :] * pl.reciprocal(denom, approx=False)  # (BB, D)
    o_ref[...] = out.astype(o_ref.dtype)


def attention_pooling(x, w, b=None, *, block_b=None):
    """Attention pooling.  x: (B, T, D), w: (D, 1) or (D,).  Returns (B, D).

    The Linear bias `b` is accepted for API parity with nn.Linear but is a
    mathematical no-op (softmax shift-invariance), so it is not passed to the
    kernel.
    """
    B, T, D = x.shape
    del b  # softmax shift-invariance: the bias cannot affect the output

    itemsize = jnp.dtype(x.dtype).itemsize
    row_bytes = T * D * itemsize
    if block_b is None:
        # Aim for >= ~4 MiB per input block (per-step overhead ~0.35 us; big
        # tiles are the main lever for staying on the HBM roofline).  The
        # raised vmem limit below keeps the double-buffered pair legal on
        # v5e/v6e/v7x for blocks in this range.
        block_b = max(8, (4 * 1024 * 1024) // max(row_bytes, 1))
        block_b = int(min(block_b, 1024))

    BB = int(min(block_b, B))
    if BB < B:
        # Keep output blocks sublane-aligned (multiple of 8) when tiling B.
        BB = max(8, (BB // 8) * 8)

    w_row = jnp.reshape(w, (1, D)).astype(x.dtype)  # lane-dense resident weight row

    grid = (pl.cdiv(B, BB),)
    return pl.pallas_call(
        attention_pooling_kernel,
        out_shape=jax.ShapeDtypeStruct((B, D), x.dtype),
        grid_spec=pltpu.PrefetchScalarGridSpec(
            num_scalar_prefetch=0,
            grid=grid,
            in_specs=[
                # Partial trailing block (B % BB != 0) handled by Pallas: OOB
                # input rows hold garbage but only feed masked output rows.
                pl.BlockSpec((BB, T, D), lambda i: (i, 0, 0)),
                pl.BlockSpec((1, D), lambda i: (0, 0)),   # shared weight (resident)
            ],
            # NOTE: if D is not a multiple of 128 in real configs, this store
            # is masked / lane-underfilled; pad D upstream for best efficiency.
            out_specs=pl.BlockSpec((BB, D), lambda i: (i, 0)),
        ),
        compiler_params=pltpu.CompilerParams(
            dimension_semantics=("parallel",),
            # Above the 16/32 MiB default scoped limits (v5e / v6e / v7x) so
            # large blocks double-buffer; safely under v7x's 64 MiB physical.
            vmem_limit_bytes=48 * 1024 * 1024,
        ),
    )(x, w_row)


def _reference(x, w, b):
    w_col = jnp.reshape(w, (x.shape[-1], 1))
    scores = jnp.einsum("btd,do->bto", x, w_col)[..., 0]          # (B, T)
    if b is not None:
        scores = scores + jnp.reshape(b, (-1,))[0]
    attn = jax.nn.softmax(scores, axis=-1)                        # (B, T)
    return jnp.sum(x * attn[..., None], axis=1)                   # (B, D)


if __name__ == "__main__":
    key = jax.random.PRNGKey(0)
    kx, kw, kb, kx2 = jax.random.split(key, 4)

    B, T, D = 2, 8, 32  # batch, sequence length, d_model
    x = jax.random.normal(kx, (B, T, D), dtype=jnp.float32)

    # Deterministic init matching nn.Linear(d_model, 1): U(-1/sqrt(D), 1/sqrt(D))
    bound = 1.0 / (D ** 0.5)
    w = jax.random.uniform(kw, (D, 1), dtype=jnp.float32, minval=-bound, maxval=bound)
    b = jax.random.uniform(kb, (1,), dtype=jnp.float32, minval=-bound, maxval=bound)

    out = jax.block_until_ready(attention_pooling(x, w, b))
    ref = _reference(x, w, b)
    assert out.shape == (B, D)
    assert jnp.allclose(out, ref, atol=1e-5, rtol=1e-5), (
        f"max abs err = {jnp.max(jnp.abs(out - ref))}")

    # Exercise the no-pad partial-trailing-block path (B not a multiple of BB).
    B2 = 10
    x2 = jax.random.normal(kx2, (B2, T, D), dtype=jnp.float32)
    out2 = jax.block_until_ready(attention_pooling(x2, w, b, block_b=8))
    ref2 = _reference(x2, w, b)
    assert out2.shape == (B2, D)
    assert jnp.allclose(out2, ref2, atol=1e-5, rtol=1e-5), (
        f"max abs err = {jnp.max(jnp.abs(out2 - ref2))}")

    print("KERNEL_OK")
</pallas_src>

<mosaic_0001>
module attributes {stable_mosaic.version = 11 : i64} {
  func.func @attention_pooling_kernel(%arg0: i32, %arg1: memref<2x8x32xf32, #tpu.memory_space<vmem>>, %arg2: memref<1x32xf32, #tpu.memory_space<vmem>>, %arg3: memref<2x32xf32, #tpu.memory_space<vmem>>) attributes {dimension_semantics = [#tpu.dimension_semantics<parallel>], iteration_bounds = array<i64: 1>, scalar_prefetch = 0 : i64, scratch_operands = 0 : i64, tpu.core_type = #tpu.core_type<tc>, window_params = [{transform_indices = @transform_0, window_bounds = array<i64: 2, 8, 32>}, {pipeline_mode = #tpu.pipeline_mode<synchronous>, transform_indices = @transform_1, window_bounds = array<i64: 1, 32>}, {transform_indices = @transform_2, window_bounds = array<i64: 2, 32>}]} {
    %c0 = arith.constant 0 : index
    %c0_0 = arith.constant 0 : index
    %0 = vector.load %arg2[%c0, %c0_0] : memref<1x32xf32, #tpu.memory_space<vmem>>, vector<1x32xf32>
    %c0_1 = arith.constant 0 : index
    %c0_2 = arith.constant 0 : index
    %c0_3 = arith.constant 0 : index
    %1 = vector.load %arg1[%c0_1, %c0_2, %c0_3] : memref<2x8x32xf32, #tpu.memory_space<vmem>>, vector<2x8x32xf32>
    %2 = vector.shape_cast %0 : vector<1x32xf32> to vector<1x1x32xf32>
    %3 = vector.broadcast %2 : vector<1x1x32xf32> to vector<2x8x32xf32>
    %4 = arith.mulf %1, %3 : vector<2x8x32xf32>
    %cst = arith.constant dense<0.000000e+00> : vector<2x8xf32>
    %5 = vector.multi_reduction <add>, %4, %cst [2] : vector<2x8x32xf32> to vector<2x8xf32>
    %cst_4 = arith.constant dense<0xFF800000> : vector<2xf32>
    %6 = vector.multi_reduction <maximumf>, %5, %cst_4 [1] : vector<2x8xf32> to vector<2xf32>
    %7 = vector.shape_cast %6 : vector<2xf32> to vector<2x1xf32>
    %8 = vector.broadcast %7 : vector<2x1xf32> to vector<2x8xf32>
    %9 = arith.subf %5, %8 : vector<2x8xf32>
    %10 = math.exp %9 : vector<2x8xf32>
    %cst_5 = arith.constant dense<0.000000e+00> : vector<2xf32>
    %11 = vector.multi_reduction <add>, %10, %cst_5 [1] : vector<2x8xf32> to vector<2xf32>
    %12 = vector.shape_cast %11 : vector<2xf32> to vector<2x1xf32>
    %13 = vector.shape_cast %10 : vector<2x8xf32> to vector<2x1x8xf32>
    %c0_6 = arith.constant 0 : index
    %c0_7 = arith.constant 0 : index
    %c0_8 = arith.constant 0 : index
    %14 = vector.load %arg1[%c0_6, %c0_7, %c0_8] : memref<2x8x32xf32, #tpu.memory_space<vmem>>, vector<2x8x32xf32>
    "tpu.trace_start"() <{level = 10 : i32, message = "bqt,btd->bqd"}> : () -> ()
    %cst_9 = arith.constant dense<0.000000e+00> : vector<2x1x32xf32>
    %15 = tpu.matmul %13, %14, %cst_9 {dimension_numbers = #tpu.dot_dimension_numbers<[2], [1], [1], [2], [0, 0, 0, 1, 1, 2], [0], [0]>} : vector<2x1x8xf32>, vector<2x8x32xf32>, vector<2x1x32xf32> -> vector<2x1x32xf32>
    "tpu.trace_stop"() : () -> ()
    %16 = vector.shape_cast %15 : vector<2x1x32xf32> to vector<2x32xf32>
    %17 = tpu.reciprocal %12 : vector<2x1xf32> -> vector<2x1xf32>
    %18 = vector.broadcast %17 : vector<2x1xf32> to vector<2x32xf32>
    %19 = arith.mulf %16, %18 : vector<2x32xf32>
    %c0_10 = arith.constant 0 : index
    %c0_11 = arith.constant 0 : index
    %20 = vector.load %arg3[%c0_10, %c0_11] : memref<2x32xf32, #tpu.memory_space<vmem>>, vector<2x32xf32>
    tpu.vector_store %arg3[%c0_10, %c0_11], %19 {strides = array<i32>} : memref<2x32xf32, #tpu.memory_space<vmem>>, vector<2x32xf32>,
    return
  }
  func.func @transform_0(%arg0: i32) -> (i32, i32, i32) {
    %c0_i32 = arith.constant 0 : i32
    %c0_i32_0 = arith.constant 0 : i32
    %c0_i32_1 = arith.constant 0 : i32
    return %arg0, %c0_i32, %c0_i32_0 : i32, i32, i32
  }
  func.func @transform_1(%arg0: i32) -> (i32, i32) {
    %c0_i32 = arith.constant 0 : i32
    %c0_i32_0 = arith.constant 0 : i32
    %c0_i32_1 = arith.constant 0 : i32
    return %c0_i32, %c0_i32_0 : i32, i32
  }
  func.func @transform_2(%arg0: i32) -> (i32, i32) {
    %c0_i32 = arith.constant 0 : i32
    %c0_i32_0 = arith.constant 0 : i32
    return %arg0, %c0_i32 : i32, i32
  }
}

</mosaic_0001>

<llo_original>
// kernel: tpu_custom_call.1
$region0: #{tpu_custom_call.1}
  #allocation0 [shape = 'u32[]', space=smem, size = 0x4, offset = 0x4, fixed_abs, tag = 'smem constant byte address 0x4 - core index']
  #allocation1 [shape = 'u32[144,128]{1,0:T(1,128)}', space=vmem, size = 0x12000, scoped, tag = 'internal scratch']
  %s0 = inlined_call_operand.hbm [shape: f32[2,8,32], index: 0, kind: input, shape index: {}]
  %s1 = inlined_call_operand.vmem [shape: f32[1,32], index: 1, kind: input, shape index: {}]
  %s2 = inlined_call_operand.hbm [shape: f32[2,32], index: 2, kind: output, shape index: {}]
  %s3 = sld [smem:[#allocation0]]
  $region22: #{tpu_custom_call.1} parent=0
    _
  %s5 = ssub.s32 1, %s3
  %s6 = scalar_select 0, %s5, %s3
  $region1: #{tpu_custom_call.1} parent=0
    #allocation2 [shape = 'u8[8192]{0}', space=vmem, size = 0x2000, scoped, tag = 'input window, operand 0, single buffered']
    #allocation3 [shape = 's32[1]{0}', space=sflag, size = 0x4, scoped, tag = 'scoped memory for tpu_custom_call.1']
    #allocation4 [shape = 's32[1]{0}', space=sflag, size = 0x4, scoped, tag = 'scoped memory for tpu_custom_call.1']
    #allocation5 [shape = 'u8[1024]{0}', space=vmem, size = 0x400, scoped, tag = 'output window, operand 0, single buffered']
    %7 = vsyncpa [#allocation3], 0
    %8 = vsyncpa [#allocation4], 0
    // Predicated region
    $region2: #{tpu_custom_call.1} parent=1 // pred_check
      _
    $region3: #{tpu_custom_call.1} parent=1 // pred_check_branch
      %10 = sbr.rel (0) target = $region5
    $region4: #{tpu_custom_call.1} parent=1 // pred_region
      %s12 = ssub.s32 256, 256
      %13 = vsyncadd [#allocation3], %s12
      %s14 = sshll.u32 [#allocation2], 4
      %s15 = int_to_ptr.vmem [resolvable:$true] %s14
      %20 = dma.hbm_to_vmem [thread:$0]  %s0, 256, %s15, [#allocation3], 128, 128, 8
    $region5: #{tpu_custom_call.1} parent=1 // pred_fallthru
      _
    // Predicated region
    $region6: #{tpu_custom_call.1} parent=1 // pred_check
      _
    $region7: #{tpu_custom_call.1} parent=1 // pred_check_branch
      %22 = sbr.rel (0) target = $region9
    $region8: #{tpu_custom_call.1} parent=1 // pred_region
      _
    $region9: #{tpu_custom_call.1} parent=1 // pred_fallthru
      _
    // Predicated region
    $region10: #{tpu_custom_call.1} parent=1 // pred_check
      _
    $region11: #{tpu_custom_call.1} parent=1 // pred_check_branch
      %24 = sbr.rel (0) target = $region13
    $region12: #{tpu_custom_call.1} parent=1 // pred_region
      %25 = dma.done [#allocation3], 256
    $region13: #{tpu_custom_call.1} parent=1 // pred_fallthru
      _
    %v26 = vld [vmem:[%s1] sm:$0x1]
    %v27 = vld [vmem:[#allocation2] sm:$0xff]
    %v28 = vld [vmem:[#allocation2 + $0x8] sm:$0xff]
    %v30 = vlaneseq
    %v31 = vshrl.u32 %v30, 7
    %v32 = vsub.s32 0, %v31
    %v33 = vrot.slane %v26, %v32
    %v35 = vmul.f32 %v27, %v33
    %v36 = vmul.f32 %v28, %v33
    %vm37 = vcmask 261120
    %v38 = vsel %vm37, %v35, 0.0
    %39 = vadd.xlane.f32.xlu0 %v38
    %v40 = vpop.xlane.xlu0 %39
    %v41 = vsel %vm37, %v36, 0.0
    %42 = vadd.xlane.f32.xlu0 %v41
    %v43 = vpop.xlane.xlu0 %42
    %v46 = vlaneseq
    %v47 = vand.u32 %v46, 127
    %v48 = vlaneseq
    %v49 = vshrl.u32 %v48, 7
    %v50 = vsub.s32 %v47, %v49
    %v51 = vrot.slane %v40, %v50
    %v52 = vlaneseq
    %v53 = vshrl.u32 %v52, 7
    %v54 = vsub.s32 %v47, %v53
    %v55 = vrot.slane %v43, %v54
    %vm56 = vcmask 1041409
    %v57 = vsel %vm56, %v55, %v51
    %vm59 = vcmask 58368
    %v60 = vsel %vm59, %v57, -inf
    %61 = vmax.xlane.f32.xlu0 %v60
    %v62 = vpop.xlane.xlu0 %61
    %v64 = vlaneseq
    %v65 = vshrl.u32 %v64, 7
    %v66 = vsub.s32 0, %v65
    %v67 = vrot.slane %v62, %v66
    %v68 = vlaneseq
    %v69 = vshrl.u32 %v68, 7
    %v70 = vsub.s32 1, %v69
    %v71 = vrot.slane %v62, %v70
    %v74 = vsub.f32 %v40, %v67
    %v75 = vsub.f32 %v43, %v71
    %v76 = vmul.f32 %v74, 1.442695
    %v77 = vpow.pop %v76
    %v78 = vmul.f32 %v75, 1.442695
    %v79 = vpow.pop %v78
    %82 = vset.pattern.permute.xlu0 0
    %83 = vperm.xlu0 %82, %v77
    %v84 = vpop.permute.xlu0 %83
    %85 = vset.pattern.permute.xlu0 0
    %86 = vperm.xlu0 %85, %v79
    %v87 = vpop.permute.xlu0 %86
    %v88 = vlaneseq
    %v89 = vshrl.u32 %v88, 7
    %v90 = vsub.s32 %v47, %v89
    %v91 = vrot.slane %v84, %v90
    %v92 = vlaneseq
    %v93 = vshrl.u32 %v92, 7
    %v94 = vsub.s32 %v47, %v93
    %v95 = vrot.slane %v87, %v94
    %v96 = vsel %vm56, %v95, %v91
    %v98 = vsel %vm59, %v96, 0.0
    %99 = vadd.xlane.f32.xlu0 %v98
    %v100 = vpop.xlane.xlu0 %99
    %vm101 = vcmask 64512
    %v102 = vsel %vm101, %v91, 0
    %104 = vmatprep.subr.mxu0 0.0
    %105 = vmatpush1.msra.mxu0 %v27
    %106 = vmatprep.subr.mxu0 0.0
    %107 = vmatpush1.msra.mxu0 0.0
    %108 = vmatprep.subr.mxu0 0.0
    %109 = vmatpush1.msra.mxu0 0.0
    %110 = vmatprep.subr.mxu0 0.0
    %111 = vmatpush1.msra.mxu0 0.0
    %112 = vmatprep.subr.mxu0 0.0
    %113 = vmatpush1.msra.mxu0 0.0
    %114 = vmatprep.subr.mxu0 0.0
    %115 = vmatpush1.msra.mxu0 0.0
    %116 = vmatprep.subr.mxu0 0.0
    %117 = vmatpush1.msra.mxu0 0.0
    %118 = vmatprep.subr.mxu0 0.0
    %119 = vmatpush1.msra.mxu0 0.0
    %120 = vmatprep.subr.mxu0 0.0
    %121 = vmatpush1.msra.mxu0 0.0
    %122 = vmatprep.subr.mxu0 0.0
    %123 = vmatpush1.msra.mxu0 0.0
    %124 = vmatprep.subr.mxu0 0.0
    %125 = vmatpush1.msra.mxu0 0.0
    %126 = vmatprep.subr.mxu0 0.0
    %127 = vmatpush1.msra.mxu0 0.0
    %128 = vmatprep.subr.mxu0 0.0
    %129 = vmatpush1.msra.mxu0 0.0
    %130 = vmatprep.subr.mxu0 0.0
    %131 = vmatpush1.msra.mxu0 0.0
    %132 = vmatprep.subr.mxu0 0.0
    %133 = vmatpush1.msra.mxu0 0.0
    %134 = vmatprep.subr.mxu0 0.0
    %135 = vmatpush1.msra.mxu0 0.0
    %136 = vmatprep.subr.mxu0 0.0
    %137 = vmatpush1.msra.mxu0 0.0
    %138 = vmatprep.subr.mxu0 0.0
    %139 = vmatpush1.msra.mxu0 0.0
    %140 = vmatprep.subr.mxu0 0.0
    %141 = vmatpush1.msra.mxu0 0.0
    %142 = vmatprep.subr.mxu0 0.0
    %143 = vmatpush1.msra.mxu0 0.0
    %144 = vmatprep.subr.mxu0 0.0
    %145 = vmatpush1.msra.mxu0 0.0
    %146 = vmatprep.subr.mxu0 0.0
    %147 = vmatpush1.msra.mxu0 0.0
    %148 = vmatprep.subr.mxu0 0.0
    %149 = vmatpush1.msra.mxu0 0.0
    %150 = vmatprep.subr.mxu0 0.0
    %151 = vmatpush1.msra.mxu0 0.0
    %152 = vmatprep.subr.mxu0 0.0
    %153 = vmatpush1.msra.mxu0 0.0
    %154 = vmatprep.subr.mxu0 0.0
    %155 = vmatpush1.msra.mxu0 0.0
    %156 = vmatprep.subr.mxu0 0.0
    %157 = vmatpush1.msra.mxu0 0.0
    %158 = vmatprep.subr.mxu0 0.0
    %159 = vmatpush1.msra.mxu0 0.0
    %160 = vmatprep.subr.mxu0 0.0
    %161 = vmatpush1.msra.mxu0 0.0
    %162 = vmatprep.subr.mxu0 0.0
    %163 = vmatpush1.msra.mxu0 0.0
    %164 = vmatprep.subr.mxu0 0.0
    %165 = vmatpush1.msra.mxu0 0.0
    %166 = vmatprep.subr.mxu0 0.0
    %167 = vmatpush1.msra.mxu0 0.0
    %168 = vmatprep.mubr.f32.mxu0 0.0
    %169 = vmatmul.mubr.f32.gmra.mrb[0].mxu0 %v102
    %v170 = vpop.f32.mrb[0].mxu0
    %v171 = vadd.f32 0.0, %v170
    %v172 = vpop.f32.mrb[0].mxu0
    %173 = vdwg.mxu0
    %v174 = vsel %vm101, %v95, 0
    %176 = vmatprep.subr.mxu0 0.0
    %177 = vmatpush1.msra.mxu0 %v28
    %178 = vmatprep.subr.mxu0 0.0
    %179 = vmatpush1.msra.mxu0 0.0
    %180 = vmatprep.subr.mxu0 0.0
    %181 = vmatpush1.msra.mxu0 0.0
    %182 = vmatprep.subr.mxu0 0.0
    %183 = vmatpush1.msra.mxu0 0.0
    %184 = vmatprep.subr.mxu0 0.0
    %185 = vmatpush1.msra.mxu0 0.0
    %186 = vmatprep.subr.mxu0 0.0
    %187 = vmatpush1.msra.mxu0 0.0
    %188 = vmatprep.subr.mxu0 0.0
    %189 = vmatpush1.msra.mxu0 0.0
    %190 = vmatprep.subr.mxu0 0.0
    %191 = vmatpush1.msra.mxu0 0.0
    %192 = vmatprep.subr.mxu0 0.0
    %193 = vmatpush1.msra.mxu0 0.0
    %194 = vmatprep.subr.mxu0 0.0
    %195 = vmatpush1.msra.mxu0 0.0
    %196 = vmatprep.subr.mxu0 0.0
    %197 = vmatpush1.msra.mxu0 0.0
    %198 = vmatprep.subr.mxu0 0.0
    %199 = vmatpush1.msra.mxu0 0.0
    %200 = vmatprep.subr.mxu0 0.0
    %201 = vmatpush1.msra.mxu0 0.0
    %202 = vmatprep.subr.mxu0 0.0
    %203 = vmatpush1.msra.mxu0 0.0
    %204 = vmatprep.subr.mxu0 0.0
    %205 = vmatpush1.msra.mxu0 0.0
    %206 = vmatprep.subr.mxu0 0.0
    %207 = vmatpush1.msra.mxu0 0.0
    %208 = vmatprep.subr.mxu0 0.0
    %209 = vmatpush1.msra.mxu0 0.0
    %210 = vmatprep.subr.mxu0 0.0
    %211 = vmatpush1.msra.mxu0 0.0
    %212 = vmatprep.subr.mxu0 0.0
    %213 = vmatpush1.msra.mxu0 0.0
    %214 = vmatprep.subr.mxu0 0.0
    %215 = vmatpush1.msra.mxu0 0.0
    %216 = vmatprep.subr.mxu0 0.0
    %217 = vmatpush1.msra.mxu0 0.0
    %218 = vmatprep.subr.mxu0 0.0
    %219 = vmatpush1.msra.mxu0 0.0
    %220 = vmatprep.subr.mxu0 0.0
    %221 = vmatpush1.msra.mxu0 0.0
    %222 = vmatprep.subr.mxu0 0.0
    %223 = vmatpush1.msra.mxu0 0.0
    %224 = vmatprep.subr.mxu0 0.0
    %225 = vmatpush1.msra.mxu0 0.0
    %226 = vmatprep.subr.mxu0 0.0
    %227 = vmatpush1.msra.mxu0 0.0
    %228 = vmatprep.subr.mxu0 0.0
    %229 = vmatpush1.msra.mxu0 0.0
    %230 = vmatprep.subr.mxu0 0.0
    %231 = vmatpush1.msra.mxu0 0.0
    %232 = vmatprep.subr.mxu0 0.0
    %233 = vmatpush1.msra.mxu0 0.0
    %234 = vmatprep.subr.mxu0 0.0
    %235 = vmatpush1.msra.mxu0 0.0
    %236 = vmatprep.subr.mxu0 0.0
    %237 = vmatpush1.msra.mxu0 0.0
    %238 = vmatprep.subr.mxu0 0.0
    %239 = vmatpush1.msra.mxu0 0.0
    %240 = vmatprep.mubr.f32.mxu0 0.0
    %241 = vmatmul.mubr.f32.gmra.mrb[0].mxu0 %v174
    %v242 = vpop.f32.mrb[0].mxu0
    %v243 = vadd.f32 0.0, %v242
    %v244 = vpop.f32.mrb[0].mxu0
    %245 = vdwg.mxu0
    %v246 = vrcp.pop %v100
    %v248 = vrot.slane %v246, 1
    %v251 = vmul.f32 %v171, %v246
    %v252 = vmul.f32 %v243, %v248
    %v255 = vrot.slane %v252, 7
    %v256 = vsel %vm56, %v255, %v251
    %vm258 = vcmask 254976
    %259 = vst.msk [vmem:[#allocation5] sm:$0x3] %vm258, %v256
    // Predicated region
    $region14: #{tpu_custom_call.1} parent=1 // pred_check
      _
    $region15: #{tpu_custom_call.1} parent=1 // pred_check_branch
      %261 = sbr.rel (0) target = $region17
    $region16: #{tpu_custom_call.1} parent=1 // pred_region
      %s263 = ssub.s32 32, 32
      %264 = vsyncadd [#allocation4], %s263
      %s266 = sshll.u32 [#allocation5], 4
      %s267 = int_to_ptr.vmem [resolvable:$true] %s266
      %269 = dma.vmem_to_hbm [thread:$0]  %s267, 32, %s2, [#allocation4]
    $region17: #{tpu_custom_call.1} parent=1 // pred_fallthru
      _
    // Predicated region
    $region18: #{tpu_custom_call.1} parent=1 // pred_check
      _
    $region19: #{tpu_custom_call.1} parent=1 // pred_check_branch
      %271 = sbr.rel (0) target = $region21
    $region20: #{tpu_custom_call.1} parent=1 // pred_region
      %272 = dma.done [#allocation4], 32
    $region21: #{tpu_custom_call.1} parent=1 // pred_fallthru
      _
    %273 = vsyncpa [#allocation3], 1
    %274 = vsyncpa [#allocation4], 1

</llo_original>
